<compile_context>
chip_gen: v6e
topology: v6e:2x2x1
jax: 0.10.0
libtpu: 0.0.40
codegen_flags: <defaults>
</compile_context>

<pallas_src>
import functools

import jax
import jax.numpy as jnp
from jax.experimental import pallas as pl
from jax.experimental.pallas import tpu as pltpu


def _ce_kernel(pr_ref, gt_ref, nll_ref, m_sc, l_sc, t_sc, *, tile_c):
    """Process one (tile_n, tile_c) logits chunk with an online logsumexp."""
    k = pl.program_id(1)

    @pl.when(k == 0)
    def _init():
        m_sc[...] = jnp.full_like(m_sc, -jnp.inf)
        l_sc[...] = jnp.zeros_like(l_sc)
        t_sc[...] = jnp.zeros_like(t_sc)

    x = pr_ref[...]                       # (tile_n, tile_c), native dtype (f32 / bf16)
    tgt = gt_ref[...]                     # (tile_n, 1) int32; -1 marks a padded row

    # --- online logsumexp update (max stays native; exp in f32 for accuracy) ---
    m_loc = jnp.max(x, axis=-1, keepdims=True).astype(jnp.float32)
    m_new = jnp.maximum(m_sc[...], m_loc)
    p_sum = jnp.sum(jnp.exp(x.astype(jnp.float32) - m_new), axis=-1, keepdims=True)
    l_sc[...] = jnp.exp(m_sc[...] - m_new) * l_sc[...] + p_sum
    m_sc[...] = m_new

    # --- one-hot gather of x[i, tgt_i], restricted to this class chunk (native dtype) ---
    cols = k * tile_c + jax.lax.broadcasted_iota(jnp.int32, x.shape, 1)
    hit = cols == tgt
    t_sc[...] += jnp.sum(jnp.where(hit, x, jnp.zeros_like(x)),
                         axis=-1, keepdims=True).astype(jnp.float32)

    # --- finalize on the last class chunk ---
    @pl.when(k == pl.num_programs(1) - 1)
    def _finalize():
        valid = (tgt >= 0).astype(jnp.float32)       # padded / negative labels -> 0
        nll_ref[...] = valid * (m_sc[...] + jnp.log(l_sc[...]) - t_sc[...])


def _vmem_capacity_bytes():
    try:
        return int(pltpu.get_tpu_info().vmem_capacity_bytes)
    except Exception:
        return 64 * 1024 * 1024          # v7x per-TensorCore VMEM (smallest generation)


def _choose_tiles(N, C, itemsize):
    cap = _vmem_capacity_bytes()
    budget = cap // 2                    # in-kernel working-set budget

    # Class-axis chunking (online logsumexp) only when a row of logits is very wide.
    tile_c = C
    if C > 8192:
        for cand in range(4096, 127, -128):
            if C % cand == 0:
                tile_c = cand
                break

    # Bytes actually live per logits element: 2x native input (double-buffered block)
    # + f32 exp input/output + iota / select temporaries.
    bytes_per_elem = 2 * itemsize + 16
    # Lane-padded per-row tiles: labels + output (x2 buffers) + 3 f32 scratch rows.
    per_row_overhead = 7 * 128 * 4
    per_row = tile_c * bytes_per_elem + per_row_overhead

    max_rows = max(8, (budget // per_row) // 8 * 8)
    # Keep >= 2 batch tiles when possible so the "parallel" axis can use both v7x cores.
    two_step_cap = max(8, ((N + 1) // 2 + 7) // 8 * 8)
    n_rounded = (N + 7) // 8 * 8
    tile_n = min(max_rows, two_step_cap, n_rounded)

    est = 2 * (tile_n * tile_c * itemsize + 2 * tile_n * 128 * 4) + 3 * tile_n * 128 * 4
    vmem_limit = int(min(cap, max(budget + (16 << 20), est + (16 << 20))))
    return tile_n, tile_c, vmem_limit


def cross_entropy_loss(pr, gt):
    """Mean-reduced cross entropy: mean_i(-log_softmax(pr)[i, gt[i]])."""
    N, C = pr.shape
    itemsize = jnp.dtype(pr.dtype).itemsize
    tile_n, tile_c, vmem_limit = _choose_tiles(N, C, itemsize)
    assert C % tile_c == 0

    num_tiles = -(-N // tile_n)
    num_chunks = C // tile_c
    n_pad = num_tiles * tile_n

    gt2 = gt.astype(jnp.int32).reshape(N, 1)
    if n_pad != N:
        pr = jnp.pad(pr, ((0, n_pad - N), (0, 0)))
        gt2 = jnp.pad(gt2, ((0, n_pad - N), (0, 0)), constant_values=-1)

    nll = pl.pallas_call(
        functools.partial(_ce_kernel, tile_c=tile_c),
        out_shape=jax.ShapeDtypeStruct((n_pad, 1), jnp.float32),
        grid_spec=pltpu.PrefetchScalarGridSpec(
            num_scalar_prefetch=0,
            grid=(num_tiles, num_chunks),
            in_specs=[
                # logits: one (tile_n, tile_c) block per grid step
                pl.BlockSpec((tile_n, tile_c), lambda i, k: (i, k)),
                # labels: small per-tile block, constant across the class axis
                pl.BlockSpec((tile_n, 1), lambda i, k: (i, 0)),
            ],
            out_specs=pl.BlockSpec((tile_n, 1), lambda i, k: (i, 0)),
            scratch_shapes=[pltpu.VMEM((tile_n, 1), jnp.float32)] * 3,  # m, l, x_tgt
        ),
        compiler_params=pltpu.CompilerParams(
            dimension_semantics=("parallel", "arbitrary"),
            vmem_limit_bytes=vmem_limit,
        ),
    )(pr, gt2)

    # Padded rows were masked to 0 in-kernel; divide by the true batch size.
    return jnp.sum(nll) / jnp.float32(N)


def _reference(pr, gt):
    logp = jax.nn.log_softmax(pr.astype(jnp.float32), axis=-1)
    nll = -jnp.take_along_axis(logp, gt[:, None].astype(jnp.int32), axis=-1)[:, 0]
    return jnp.mean(nll)


if __name__ == "__main__":
    key = jax.random.PRNGKey(0)
    k1, k2, k3, k4 = jax.random.split(key, 4)

    # Small shapes consistent with the module: batch=16, num_classes=32.
    N, C = 16, 32
    pr = jax.random.normal(k1, (N, C), dtype=jnp.float32)
    gt = jax.random.randint(k2, (N,), 0, C, dtype=jnp.int32)

    loss = cross_entropy_loss(pr, gt)
    jax.block_until_ready(loss)
    ref = _reference(pr, gt)
    assert jnp.allclose(loss, ref, atol=1e-5, rtol=1e-5), (loss, ref)

    # Ragged batch + non-128 class count + bf16 logits (exercises the padded/masked tile).
    N2, C2 = 13, 40
    pr2 = jax.random.normal(k3, (N2, C2), dtype=jnp.float32).astype(jnp.bfloat16)
    gt_b = jax.random.randint(k4, (N2,), 0, C2, dtype=jnp.int32)
    loss2 = cross_entropy_loss(pr2, gt_b)
    jax.block_until_ready(loss2)
    ref2 = _reference(pr2.astype(jnp.float32), gt_b)
    assert jnp.allclose(loss2, ref2, atol=2e-3, rtol=2e-3), (loss2, ref2)

    print("KERNEL_OK")
</pallas_src>

<mosaic_0001>
module attributes {stable_mosaic.version = 11 : i64} {
  func.func @_ce_kernel(%arg0: i32, %arg1: i32, %arg2: memref<8x32xf32, #tpu.memory_space<vmem>>, %arg3: memref<8x1xi32, #tpu.memory_space<vmem>>, %arg4: memref<8x1xf32, #tpu.memory_space<vmem>>, %arg5: memref<8x1xf32, #tpu.memory_space<vmem>>, %arg6: memref<8x1xf32, #tpu.memory_space<vmem>>, %arg7: memref<8x1xf32, #tpu.memory_space<vmem>>) attributes {dimension_semantics = [#tpu.dimension_semantics<parallel>, #tpu.dimension_semantics<arbitrary>], iteration_bounds = array<i64: 2, 1>, scalar_prefetch = 0 : i64, scratch_operands = 3 : i64, tpu.core_type = #tpu.core_type<tc>, window_params = [{transform_indices = @transform_0, window_bounds = array<i64: 8, 32>}, {transform_indices = @transform_1, window_bounds = array<i64: 8, 1>}, {transform_indices = @transform_2, window_bounds = array<i64: 8, 1>}]} {
    %c0_i32 = arith.constant 0 : i32
    %0 = arith.cmpi eq, %arg1, %c0_i32 : i32
    %1 = arith.extui %0 : i1 to i32
    %c0_i32_0 = arith.constant 0 : i32
    %2 = arith.cmpi ne, %1, %c0_i32_0 : i32
    scf.if %2 {
      %cst_23 = arith.constant 0xFF800000 : f32
      %38 = vector.broadcast %cst_23 : f32 to vector<8x1xf32>
      %c0_24 = arith.constant 0 : index
      %c0_25 = arith.constant 0 : index
      %39 = vector.load %arg5[%c0_24, %c0_25] : memref<8x1xf32, #tpu.memory_space<vmem>>, vector<8x1xf32>
      tpu.vector_store %arg5[%c0_24, %c0_25], %38 {strides = array<i32>} : memref<8x1xf32, #tpu.memory_space<vmem>>, vector<8x1xf32>,
      %cst_26 = arith.constant 0.000000e+00 : f32
      %40 = vector.broadcast %cst_26 : f32 to vector<8x1xf32>
      %c0_27 = arith.constant 0 : index
      %c0_28 = arith.constant 0 : index
      %41 = vector.load %arg6[%c0_27, %c0_28] : memref<8x1xf32, #tpu.memory_space<vmem>>, vector<8x1xf32>
      tpu.vector_store %arg6[%c0_27, %c0_28], %40 {strides = array<i32>} : memref<8x1xf32, #tpu.memory_space<vmem>>, vector<8x1xf32>,
      %cst_29 = arith.constant 0.000000e+00 : f32
      %42 = vector.broadcast %cst_29 : f32 to vector<8x1xf32>
      %c0_30 = arith.constant 0 : index
      %c0_31 = arith.constant 0 : index
      %43 = vector.load %arg7[%c0_30, %c0_31] : memref<8x1xf32, #tpu.memory_space<vmem>>, vector<8x1xf32>
      tpu.vector_store %arg7[%c0_30, %c0_31], %42 {strides = array<i32>} : memref<8x1xf32, #tpu.memory_space<vmem>>, vector<8x1xf32>,
    } else {
    }
    %c0 = arith.constant 0 : index
    %c0_1 = arith.constant 0 : index
    %3 = vector.load %arg2[%c0, %c0_1] : memref<8x32xf32, #tpu.memory_space<vmem>>, vector<8x32xf32>
    %c0_2 = arith.constant 0 : index
    %c0_3 = arith.constant 0 : index
    %4 = vector.load %arg3[%c0_2, %c0_3] : memref<8x1xi32, #tpu.memory_space<vmem>>, vector<8x1xi32>
    %cst = arith.constant dense<0xFF800000> : vector<8xf32>
    %5 = vector.multi_reduction <maximumf>, %3, %cst [1] : vector<8x32xf32> to vector<8xf32>
    %6 = vector.shape_cast %5 : vector<8xf32> to vector<8x1xf32>
    %c0_4 = arith.constant 0 : index
    %c0_5 = arith.constant 0 : index
    %7 = vector.load %arg5[%c0_4, %c0_5] : memref<8x1xf32, #tpu.memory_space<vmem>>, vector<8x1xf32>
    %8 = arith.maximumf %7, %6 : vector<8x1xf32>
    %9 = vector.broadcast %8 : vector<8x1xf32> to vector<8x32xf32>
    %10 = arith.subf %3, %9 : vector<8x32xf32>
    %11 = math.exp %10 : vector<8x32xf32>
    %cst_6 = arith.constant dense<0.000000e+00> : vector<8xf32>
    %12 = vector.multi_reduction <add>, %11, %cst_6 [1] : vector<8x32xf32> to vector<8xf32>
    %13 = vector.shape_cast %12 : vector<8xf32> to vector<8x1xf32>
    %c0_7 = arith.constant 0 : index
    %c0_8 = arith.constant 0 : index
    %14 = vector.load %arg5[%c0_7, %c0_8] : memref<8x1xf32, #tpu.memory_space<vmem>>, vector<8x1xf32>
    %15 = arith.subf %14, %8 : vector<8x1xf32>
    %16 = math.exp %15 : vector<8x1xf32>
    %c0_9 = arith.constant 0 : index
    %c0_10 = arith.constant 0 : index
    %17 = vector.load %arg6[%c0_9, %c0_10] : memref<8x1xf32, #tpu.memory_space<vmem>>, vector<8x1xf32>
    %18 = arith.mulf %16, %17 : vector<8x1xf32>
    %19 = arith.addf %18, %13 : vector<8x1xf32>
    %c0_11 = arith.constant 0 : index
    %c0_12 = arith.constant 0 : index
    %20 = vector.load %arg6[%c0_11, %c0_12] : memref<8x1xf32, #tpu.memory_space<vmem>>, vector<8x1xf32>
    tpu.vector_store %arg6[%c0_11, %c0_12], %19 {strides = array<i32>} : memref<8x1xf32, #tpu.memory_space<vmem>>, vector<8x1xf32>,
    %c0_13 = arith.constant 0 : index
    %c0_14 = arith.constant 0 : index
    %21 = vector.load %arg5[%c0_13, %c0_14] : memref<8x1xf32, #tpu.memory_space<vmem>>, vector<8x1xf32>
    tpu.vector_store %arg5[%c0_13, %c0_14], %8 {strides = array<i32>} : memref<8x1xf32, #tpu.memory_space<vmem>>, vector<8x1xf32>,
    %c32_i32 = arith.constant 32 : i32
    %22 = arith.muli %arg1, %c32_i32 : i32
    %23 = tpu.iota {dimensions = array<i32: 1>} : vector<8x32xi32>
    %24 = vector.broadcast %22 : i32 to vector<8x32xi32>
    %25 = arith.addi %24, %23 : vector<8x32xi32>
    %26 = vector.broadcast %4 : vector<8x1xi32> to vector<8x32xi32>
    %27 = arith.cmpi eq, %25, %26 : vector<8x32xi32>
    %c0_15 = arith.constant 0 : index
    %c0_16 = arith.constant 0 : index
    %28 = vector.load %arg7[%c0_15, %c0_16] : memref<8x1xf32, #tpu.memory_space<vmem>>, vector<8x1xf32>
    %cst_17 = arith.constant 0.000000e+00 : f32
    %29 = vector.broadcast %cst_17 : f32 to vector<8x32xf32>
    %30 = arith.select %27, %3, %29 : vector<8x32xi1>, vector<8x32xf32>
    %cst_18 = arith.constant dense<0.000000e+00> : vector<8xf32>
    %31 = vector.multi_reduction <add>, %30, %cst_18 [1] : vector<8x32xf32> to vector<8xf32>
    %32 = vector.shape_cast %31 : vector<8xf32> to vector<8x1xf32>
    %33 = arith.addf %28, %32 : vector<8x1xf32>
    %c0_19 = arith.constant 0 : index
    %c0_20 = arith.constant 0 : index
    %34 = vector.load %arg7[%c0_19, %c0_20] : memref<8x1xf32, #tpu.memory_space<vmem>>, vector<8x1xf32>
    tpu.vector_store %arg7[%c0_19, %c0_20], %33 {strides = array<i32>} : memref<8x1xf32, #tpu.memory_space<vmem>>, vector<8x1xf32>,
    %c0_i32_21 = arith.constant 0 : i32
    %35 = arith.cmpi eq, %arg1, %c0_i32_21 : i32
    %36 = arith.extui %35 : i1 to i32
    %c0_i32_22 = arith.constant 0 : i32
    %37 = arith.cmpi ne, %36, %c0_i32_22 : i32
    scf.if %37 {
      %c0_i32_23 = arith.constant 0 : i32
      %38 = vector.broadcast %c0_i32_23 : i32 to vector<8x1xi32>
      %39 = arith.cmpi sge, %4, %38 : vector<8x1xi32>
      %40 = arith.extui %39 : vector<8x1xi1> to vector<8x1xi32>
      %41 = arith.sitofp %40 : vector<8x1xi32> to vector<8x1xf32>
      %c0_24 = arith.constant 0 : index
      %c0_25 = arith.constant 0 : index
      %42 = vector.load %arg5[%c0_24, %c0_25] : memref<8x1xf32, #tpu.memory_space<vmem>>, vector<8x1xf32>
      %c0_26 = arith.constant 0 : index
      %c0_27 = arith.constant 0 : index
      %43 = vector.load %arg6[%c0_26, %c0_27] : memref<8x1xf32, #tpu.memory_space<vmem>>, vector<8x1xf32>
      %44 = math.log %43 : vector<8x1xf32>
      %45 = arith.addf %42, %44 : vector<8x1xf32>
      %c0_28 = arith.constant 0 : index
      %c0_29 = arith.constant 0 : index
      %46 = vector.load %arg7[%c0_28, %c0_29] : memref<8x1xf32, #tpu.memory_space<vmem>>, vector<8x1xf32>
      %47 = arith.subf %45, %46 : vector<8x1xf32>
      %48 = arith.mulf %41, %47 : vector<8x1xf32>
      %c0_30 = arith.constant 0 : index
      %c0_31 = arith.constant 0 : index
      %49 = vector.load %arg4[%c0_30, %c0_31] : memref<8x1xf32, #tpu.memory_space<vmem>>, vector<8x1xf32>
      tpu.vector_store %arg4[%c0_30, %c0_31], %48 {strides = array<i32>} : memref<8x1xf32, #tpu.memory_space<vmem>>, vector<8x1xf32>,
    } else {
    }
    return
  }
  func.func @transform_0(%arg0: i32, %arg1: i32) -> (i32, i32) {
    %c0_i32 = arith.constant 0 : i32
    return %arg0, %arg1 : i32, i32
  }
  func.func @transform_1(%arg0: i32, %arg1: i32) -> (i32, i32) {
    %c0_i32 = arith.constant 0 : i32
    %c0_i32_0 = arith.constant 0 : i32
    return %arg0, %c0_i32 : i32, i32
  }
  func.func @transform_2(%arg0: i32, %arg1: i32) -> (i32, i32) {
    %c0_i32 = arith.constant 0 : i32
    %c0_i32_0 = arith.constant 0 : i32
    return %arg0, %c0_i32 : i32, i32
  }
}

</mosaic_0001>

<llo_original>
// kernel: tpu_custom_call.1
$region0: #{tpu_custom_call.1}
  #allocation0 [shape = 'u32[]', space=smem, size = 0x4, offset = 0x4, fixed_abs, tag = 'smem constant byte address 0x4 - core index']
  #allocation1 [shape = 'u32[144,128]{1,0:T(1,128)}', space=vmem, size = 0x12000, scoped, tag = 'internal scratch']
  #allocation2 [shape = 'f32[8,1]{1,0:T(8,128)}', space=vmem, size = 0x1000, scoped, tag = 'scratch operand']
  #allocation3 [shape = 'f32[8,1]{1,0:T(8,128)}', space=vmem, size = 0x1000, scoped, tag = 'scratch operand']
  #allocation4 [shape = 'f32[8,1]{1,0:T(8,128)}', space=vmem, size = 0x1000, scoped, tag = 'scratch operand']
  %s0 = inlined_call_operand.vmem [shape: f32[16,32], index: 0, kind: input, shape index: {}]
  %s1 = inlined_call_operand.vmem [shape: s32[16,1], index: 1, kind: input, shape index: {}]
  %s2 = inlined_call_operand.vmem [shape: f32[16,1], index: 2, kind: output, shape index: {}]
  %s3 = sld [smem:[#allocation0]]
  $region49: #{tpu_custom_call.1} parent=0
    _
  %s5 = ssub.s32 1, %s3
  %s6 = scalar_select 0, %s5, %s3
  loop: start=0, step=1, limit=4
  $region2: #{tpu_custom_call.1} parent=0 // loop_pre_header
    _
  $region3: #{tpu_custom_call.1} parent=0 // loop_header
    %s8 = sphi 0, %s12
    %p9 = scmp.ge.s32.totalorder %s8, 4
    %s15 = sphi 0, %s27
    %s16 = sphi 0, %s23
    %s17 = sphi 0, %s15
    %s18 = sphi 0, %s16
    %s19 = sphi 0, %s17
    %s20 = sphi 0, %s18
    %s32 = sphi 0, %s34
    %s35 = sphi 0, %s32
    %s36 = sphi 0, %s35
    %s52 = sphi 0, %s36
    %s58 = sphi 0, %s60
    %s61 = sphi 0, %s58
    %s62 = sphi 0, %s61
    %s78 = sphi 0, %s62
    %s84 = sphi 0, %s86
    %s87 = sphi 0, %s84
    %s88 = sphi 0, %s87
    %s104 = sphi 0, %s88
  $region4: #{tpu_custom_call.1} parent=0 // loop_header_branch
    %11 = sbr.rel (%p9) target = $region8
  $region5: #{tpu_custom_call.1} parent=0 // loop_body
    %s13 = ssub.s32 %s8, 1
    %s14 = ssub.s32 %s8, 2
    %s21 = sadd.s32 1, %s16
    %p22 = scmp.ge.s32.totalorder %s21, 1
    %s23 = scalar_select %p22, 0, %s21
    %s24 = sadd.s32 1, %s15
    %s25 = scalar_select %p22, %s24, %s15
    %p26 = scmp.ge.s32.totalorder %s25, 2
    %s27 = scalar_select %p26, 0, %s25
    %s28 = ssub.s32 %s15, %s27
    %s29 = ssub.s32 %s16, %s23
    %s30 = sor.u32 %s28, %s29
    %p31 = scmp.eq.s32.totalorder %s30, 0
    %s33 = sadd.s32 %s32, 1
    %s34 = scalar_select %p31, %s32, %s33
    %p37 = pneg %p31
    %p38 = scmp.eq.s32.totalorder %s8, 1
    %p39 = por %p37, %p38
    %p40 = scmp.ne.s32.totalorder %s32, %s35
    %p41 = scmp.eq.s32.totalorder %s8, 0
    %p42 = por %p40, %p41
    %p43 = scmp.ne.s32.totalorder %s32, %s35
    %p44 = scmp.eq.s32.totalorder %s13, 1
    %p45 = por %p43, %p44
    %p46 = scmp.ne.s32.totalorder %s35, %s36
    %p47 = scmp.eq.s32.totalorder %s13, 0
    %p48 = por %p46, %p47
    %p49 = scmp.ne.s32.totalorder %s35, %s36
    %p50 = scmp.eq.s32.totalorder %s14, 1
    %p51 = por %p49, %p50
    %p53 = scmp.ne.s32.totalorder %s36, %s52
    %p54 = scmp.eq.s32.totalorder %s14, 0
    %p55 = por %p53, %p54
    %s56 = ssub.s32 %s15, %s27
    %p57 = scmp.eq.s32.totalorder %s56, 0
    %s59 = sadd.s32 %s58, 1
    %s60 = scalar_select %p57, %s58, %s59
    %p63 = pneg %p57
    %p64 = scmp.eq.s32.totalorder %s8, 1
    %p65 = por %p63, %p64
    %p66 = scmp.ne.s32.totalorder %s58, %s61
    %p67 = scmp.eq.s32.totalorder %s8, 0
    %p68 = por %p66, %p67
    %p69 = scmp.ne.s32.totalorder %s58, %s61
    %p70 = scmp.eq.s32.totalorder %s13, 1
    %p71 = por %p69, %p70
    %p72 = scmp.ne.s32.totalorder %s61, %s62
    %p73 = scmp.eq.s32.totalorder %s13, 0
    %p74 = por %p72, %p73
    %p75 = scmp.ne.s32.totalorder %s61, %s62
    %p76 = scmp.eq.s32.totalorder %s14, 1
    %p77 = por %p75, %p76
    %p79 = scmp.ne.s32.totalorder %s62, %s78
    %p80 = scmp.eq.s32.totalorder %s14, 0
    %p81 = por %p79, %p80
    %s82 = ssub.s32 %s15, %s27
    %p83 = scmp.eq.s32.totalorder %s82, 0
    %s85 = sadd.s32 %s84, 1
    %s86 = scalar_select %p83, %s84, %s85
    %p89 = pneg %p83
    %p90 = scmp.eq.s32.totalorder %s8, 1
    %p91 = por %p89, %p90
    %p92 = scmp.ne.s32.totalorder %s84, %s87
    %p93 = scmp.eq.s32.totalorder %s8, 0
    %p94 = por %p92, %p93
    %p95 = scmp.ne.s32.totalorder %s84, %s87
    %p96 = scmp.eq.s32.totalorder %s13, 1
    %p97 = por %p95, %p96
    %p98 = scmp.ne.s32.totalorder %s87, %s88
    %p99 = scmp.eq.s32.totalorder %s13, 0
    %p100 = por %p98, %p99
    %p101 = scmp.ne.s32.totalorder %s87, %s88
    %p102 = scmp.eq.s32.totalorder %s14, 1
    %p103 = por %p101, %p102
    %p105 = scmp.ne.s32.totalorder %s88, %s104
    %p106 = scmp.eq.s32.totalorder %s14, 0
    %p107 = por %p105, %p106
    %p108 = scmp.le.s32.totalorder 1, %s8
    %p109 = scmp.lt.s32.totalorder %s8, 3
    %p110 = pnand %p108, %p109
    %p111 = pneg %p110
    // Predicated region
    $region9: #{tpu_custom_call.1} parent=5 // pred_check
      _
    $region10: #{tpu_custom_call.1} parent=5 // pred_check_branch
      %113 = sbr.rel (%p110) target = $region12
    $region11: #{tpu_custom_call.1} parent=5 // pred_region
      %s114 = ssub.s32 %s8, 1
    $region12: #{tpu_custom_call.1} parent=5 // pred_fallthru
      _
    %p115 = scmp.lt.s32.totalorder %s8, 2
    // Predicated region
    $region13: #{tpu_custom_call.1} parent=5 // pred_check
      %p116 = pneg %p115
    $region14: #{tpu_custom_call.1} parent=5 // pred_check_branch
      %118 = sbr.rel (%p116) target = $region16
    $region15: #{tpu_custom_call.1} parent=5 // pred_region
      // Predicated region
      $region17: #{tpu_custom_call.1} parent=15 // pred_check
        %p119 = pneg %p42
      $region18: #{tpu_custom_call.1} parent=15 // pred_check_branch
        %121 = sbr.rel (%p119) target = $region20
      $region19: #{tpu_custom_call.1} parent=15 // pred_region
        %p122 = scmp.lt.s32.totalorder %s15, 1
        %s123 = scalar_select %p122, %s15, 1
        %p124 = scmp.lt.s32.totalorder %s16, 0
        %s125 = scalar_select %p124, %s16, 0
        %s126 = sadd.s32 %s125, %s123
        %s127 = smul.addr %s126, 8
        %s128 = scalar_lea.vmem %s0, %s127
      $region20: #{tpu_custom_call.1} parent=15 // pred_fallthru
        _
      // Predicated region
      $region21: #{tpu_custom_call.1} parent=15 // pred_check
        %p129 = pneg %p68
      $region22: #{tpu_custom_call.1} parent=15 // pred_check_branch
        %131 = sbr.rel (%p129) target = $region24
      $region23: #{tpu_custom_call.1} parent=15 // pred_region
        %p132 = scmp.lt.s32.totalorder %s15, 1
        %s133 = scalar_select %p132, %s15, 1
        %s134 = smul.addr %s133, 8
        %s135 = scalar_lea.vmem %s1, %s134
      $region24: #{tpu_custom_call.1} parent=15 // pred_fallthru
        _
    $region16: #{tpu_custom_call.1} parent=5 // pred_fallthru
      _
    %p136 = scmp.le.s32.totalorder 1, %s8
    %p137 = scmp.lt.s32.totalorder %s8, 3
    %p138 = pnand %p136, %p137
    %p139 = pneg %p138
    // Predicated region
    $region25: #{tpu_custom_call.1} parent=5 // pred_check
      _
    $region26: #{tpu_custom_call.1} parent=5 // pred_check_branch
      %141 = sbr.rel (%p138) target = $region28
    $region27: #{tpu_custom_call.1} parent=5 // pred_region
      %s142 = ssub.s32 %s8, 1
      %p143 = scmp.lt.s32.totalorder %s17, 1
      %s144 = scalar_select %p143, %s17, 1
      %p145 = scmp.lt.s32.totalorder %s18, 0
      %s146 = scalar_select %p145, %s18, 0
      %s147 = sadd.s32 %s146, %s144
      %s148 = smul.addr %s147, 8
      %s149 = scalar_lea.vmem %s0, %s148
      %p150 = pneg %p48
      %p151 = pneg %p45
      %p152 = scmp.lt.s32.totalorder %s17, 1
      %s153 = scalar_select %p152, %s17, 1
      %s154 = smul.addr %s153, 8
      %s155 = scalar_lea.vmem %s1, %s154
      %p156 = pneg %p74
      %p157 = pneg %p71
      %p158 = pneg %p100
      %p159 = pneg %p97
      %p160 = scmp.lt.s32.totalorder %s17, 1
      %s161 = scalar_select %p160, %s17, 1
      %s162 = smul.addr %s161, 8
      %s163 = scalar_lea.vmem %s2, %s162
      %p164 = scmp.lt.s32.totalorder %s17, 1
      %s165 = scalar_select %p164, %s17, 1
      %p166 = scmp.lt.s32.totalorder %s18, 0
      %s167 = scalar_select %p166, %s18, 0
      %s168 = sadd.s32 %s167, %s165
      %s169 = smul.addr %s168, 8
      %s170 = scalar_lea.vmem %s0, %s169
      %p171 = scmp.lt.s32.totalorder %s17, 1
      %s172 = scalar_select %p171, %s17, 1
      %s173 = smul.addr %s172, 8
      %s174 = scalar_lea.vmem %s1, %s173
      %p175 = scmp.lt.s32.totalorder %s17, 1
      %s176 = scalar_select %p175, %s17, 1
      %s177 = smul.addr %s176, 8
      %s178 = scalar_lea.vmem %s2, %s177
      %p179 = scmp.eq.s32.totalorder %s18, 0
      // Predicated region
      $region29: #{tpu_custom_call.1} parent=27 // pred_check
        %p180 = pneg %p179
      $region30: #{tpu_custom_call.1} parent=27 // pred_check_branch
        %182 = sbr.rel (%p180) target = $region32
      $region31: #{tpu_custom_call.1} parent=27 // pred_region
        %vm183 = vcmask 7168
        %184 = vst.msk [vmem:[#allocation2] sm:$0xff] %vm183, -inf
        %185 = vst.msk [vmem:[#allocation3] sm:$0xff] %vm183, 0.0
        %186 = vst.msk [vmem:[#allocation4] sm:$0xff] %vm183, 0.0
      $region32: #{tpu_custom_call.1} parent=27 // pred_fallthru
        _
      %v187 = vld [vmem:[%s170] sm:$0xff]
      %v188 = vld [vmem:[%s174] sm:$0xff]
      %vm189 = vcmask 261120
      %v190 = vsel %vm189, %v187, -inf
      %191 = vmax.xlane.f32.xlu0 %v190
      %v192 = vpop.xlane.xlu0 %191
      %v193 = vld [vmem:[#allocation2] sm:$0xff]
      %v194 = vmax.f32 %v193, %v192
      %196 = vset.pattern.permute.xlu0 0
      %197 = vperm.xlu0 %196, %v194
      %v198 = vpop.permute.xlu0 %197
      %v200 = vsub.f32 %v187, %v198
      %v201 = vmul.f32 %v200, 1.442695
      %v202 = vpow.pop %v201
      %v203 = vsel %vm189, %v202, 0.0
      %204 = vadd.xlane.f32.xlu0 %v203
      %v205 = vpop.xlane.xlu0 %204
      %v206 = vsub.f32 %v193, %v194
      %v207 = vmul.f32 %v206, 1.442695
      %v208 = vpow.pop %v207
      %v209 = vld [vmem:[#allocation3] sm:$0xff]
      %v210 = vmul.f32 %v208, %v209
      %v211 = vadd.f32 %v210, %v205
      %vm212 = vcmask 7168
      %213 = vst.msk [vmem:[#allocation3] sm:$0xff] %vm212, %v211
      %214 = vst.msk [vmem:[#allocation2] sm:$0xff] %vm212, %v194
      %s215 = smul.u32 %s18, 32
      %v216 = vlaneseq
      %v217 = vand.u32 %v216, 127
      %v218 = vstv %s215
      %v219 = vadd.s32 %v218, %v217
      %220 = vset.pattern.permute.xlu0 0
      %221 = vperm.xlu0 %220, %v188
      %v222 = vpop.permute.xlu0 %221
      %vm223 = vcmp.eq.s32.totalorder %v219, %v222
      %v224 = vld [vmem:[#allocation4] sm:$0xff]
      %v225 = vsel %vm223, %v187, 0.0
      %v226 = vsel %vm189, %v225, 0.0
      %227 = vadd.xlane.f32.xlu0 %v226
      %v228 = vpop.xlane.xlu0 %227
      %v229 = vadd.f32 %v224, %v228
      %230 = vst.msk [vmem:[#allocation4] sm:$0xff] %vm212, %v229
      // Predicated region
      $region33: #{tpu_custom_call.1} parent=27 // pred_check
        %p231 = pneg %p179
      $region34: #{tpu_custom_call.1} parent=27 // pred_check_branch
        %233 = sbr.rel (%p231) target = $region36
      $region35: #{tpu_custom_call.1} parent=27 // pred_region
        %vm234 = vcmp.ge.s32.totalorder %v188, 0
        %v235 = vsel %vm234, 1, 0
        %v236 = vcvt.s32.f32 %v235
        %v237 = vld [vmem:[#allocation2] sm:$0xff]
        %v238 = vld [vmem:[#allocation3] sm:$0xff]
        %v239 = vlog2.pop %v238
        %v240 = vmul.f32 %v239, 0.6931472
        %v241 = vadd.f32 %v237, %v240
        %v242 = vld [vmem:[#allocation4] sm:$0xff]
        %v243 = vsub.f32 %v241, %v242
        %v244 = vmul.f32 %v236, %v243
        %245 = vst.msk [vmem:[%s178] sm:$0xff] %vm212, %v244
      $region36: #{tpu_custom_call.1} parent=27 // pred_fallthru
        _
      %p246 = scmp.lt.s32.totalorder %s17, 1
      %s247 = scalar_select %p246, %s17, 1
      %s248 = smul.addr %s247, 8
      %s249 = scalar_lea.vmem %s2, %s248
      // Predicated region
      $region37: #{tpu_custom_call.1} parent=27 // pred_check
        %p250 = pneg %p97
      $region38: #{tpu_custom_call.1} parent=27 // pred_check_branch
        %252 = sbr.rel (%p250) target = $region40
      $region39: #{tpu_custom_call.1} parent=27 // pred_region
        _
      $region40: #{tpu_custom_call.1} parent=27 // pred_fallthru
        _
    $region28: #{tpu_custom_call.1} parent=5 // pred_fallthru
      _
    %p253 = scmp.le.s32.totalorder 2, %s8
    // Predicated region
    $region41: #{tpu_custom_call.1} parent=5 // pred_check
      %p254 = pneg %p253
    $region42: #{tpu_custom_call.1} parent=5 // pred_check_branch
      %256 = sbr.rel (%p254) target = $region44
    $region43: #{tpu_custom_call.1} parent=5 // pred_region
      %s257 = ssub.s32 %s8, 2
      // Predicated region
      $region45: #{tpu_custom_call.1} parent=43 // pred_check
        %p258 = pneg %p103
      $region46: #{tpu_custom_call.1} parent=43 // pred_check_branch
        %260 = sbr.rel (%p258) target = $region48
      $region47: #{tpu_custom_call.1} parent=43 // pred_region
        %p261 = scmp.lt.s32.totalorder %s19, 1
        %s262 = scalar_select %p261, %s19, 1
        %s263 = smul.addr %s262, 8
        %s264 = scalar_lea.vmem %s2, %s263
      $region48: #{tpu_custom_call.1} parent=43 // pred_fallthru
        _
    $region44: #{tpu_custom_call.1} parent=5 // pred_fallthru
      _
  $region6: #{tpu_custom_call.1} parent=0 // loop_footer
    %s12 = sadd.s32 1, %s8
  $region7: #{tpu_custom_call.1} parent=0 // loop_footer_branch
    %7 = sbr.rel target = $region3
  $region8: #{tpu_custom_call.1} parent=0 // loop_exit
    _

</llo_original>
